<compile_context>
chip_gen: v7x
topology: tpu7x:2x2x1
jax: 0.10.0
libtpu: 0.0.40
codegen_flags: <defaults>
</compile_context>

<pallas_src>
import functools

import jax
import jax.numpy as jnp
from jax.experimental import pallas as pl
from jax.experimental.pallas import tpu as pltpu


def _round_up(x, m):
    return (x + m - 1) // m * m


def _vmem_capacity_bytes():
    """Physical per-core VMEM; conservative fallback = 64 MiB (v7x)."""
    try:
        info = pltpu.get_tpu_info()
        for name in ("vmem_capacity_bytes", "vmem_bytes", "vmem_size_bytes"):
            cap = getattr(info, name, None)
            if cap:
                return int(cap)
    except Exception:
        pass
    return 64 << 20


def _downsample_kernel(x_ref, w_ref, shift_ref, o_ref):
    # x_ref:     (TM, C_in_p)      bf16 activation tile (channels-last rows)
    # w_ref:     (C_in_p, C_out_p) bf16 1x1-conv weight with BN scale folded in
    # shift_ref: (1, C_out_p)      f32 folded BN shift = beta - mean * scale
    # o_ref:     (TM, C_out_p)     bf16 output tile
    y = jnp.dot(x_ref[...], w_ref[...], preferred_element_type=jnp.float32)
    y = y + shift_ref[...]
    o_ref[...] = jnp.maximum(y, 0.0).astype(o_ref.dtype)


@functools.partial(jax.jit, static_argnames=("stride", "eps"))
def downsample_forward(x, conv_w, bn_gamma, bn_beta, bn_mean, bn_var,
                       stride=2, eps=1e-5):
    """x: (N, C_in, H, W) NCHW.  Returns (N, C_out, H_out, W_out) NCHW."""
    n, c_in, h, w = x.shape
    c_out = conv_w.shape[0]
    out_dtype = x.dtype

    # --- wrapper glue: bf16 cast FIRST, then stride-s subsample + NHWC slab --
    x_bf = x.astype(jnp.bfloat16)
    x_s = x_bf[:, :, ::stride, ::stride]                       # (N, C_in, Ho, Wo)
    ho, wo = x_s.shape[2], x_s.shape[3]
    m = n * ho * wo
    x2d = jnp.transpose(x_s, (0, 2, 3, 1)).reshape(m, c_in)    # (M, C_in) bf16

    # Pad channels to lane-dense multiples of 128 (K must be zero-padded).
    c_in_p = _round_up(c_in, 128)
    c_out_p = _round_up(c_out, 128)
    if c_in_p != c_in:
        x2d = jnp.pad(x2d, ((0, 0), (0, c_in_p - c_in)))

    # Fold eval-mode BatchNorm: scale into the weight (f32, pre-bf16-cast),
    # shift stays as the kernel epilogue bias.
    scale = bn_gamma.astype(jnp.float32) / jnp.sqrt(bn_var.astype(jnp.float32) + eps)
    shift = bn_beta.astype(jnp.float32) - bn_mean.astype(jnp.float32) * scale
    w2d = conv_w.reshape(c_out, c_in).astype(jnp.float32).T * scale[None, :]
    w2d = jnp.pad(w2d, ((0, c_in_p - c_in), (0, c_out_p - c_out))).astype(jnp.bfloat16)
    shift = jnp.pad(shift, (0, c_out_p - c_out)).reshape(1, c_out_p)

    # --- chip-aware tile size + VMEM budget --------------------------------
    budget = (_vmem_capacity_bytes() * 3) // 4      # leave compiler headroom
    resident = 2 * c_in_p * c_out_p * 2 + 2 * c_out_p * 4    # weight + shift (x2 bufs)
    per_row = 2 * 2 * (c_in_p + c_out_p)            # double-buffered bf16 in + out
    tm_max = max(16, (budget - resident) // per_row)
    tm_target = max(16, (min(2048, tm_max) // 16) * 16)
    # keep >= 2 grid steps (v7x megacore shards the 'parallel' M axis)
    tm = min(tm_target, max(16, _round_up(-(-m // 2), 16)))
    grid = (pl.cdiv(m, tm),)

    vmem_needed = (2 * tm * c_in_p * 2        # double-buffered bf16 x tiles
                   + 2 * tm * c_out_p * 2     # double-buffered bf16 out tiles
                   + 2 * c_in_p * c_out_p * 2  # resident bf16 weight (2x bufs)
                   + 2 * c_out_p * 4)          # shift
    vmem_limit = int(min(budget, max(32 << 20, 2 * vmem_needed)))

    cost = pl.CostEstimate(
        flops=2 * m * c_in_p * c_out_p,
        transcendentals=0,
        bytes_accessed=(m * c_in_p * 2
                        + c_in_p * c_out_p * 2
                        + m * c_out_p * 2
                        + c_out_p * 4),
    )

    out2d = pl.pallas_call(
        _downsample_kernel,
        out_shape=jax.ShapeDtypeStruct((m, c_out_p), jnp.bfloat16),
        grid_spec=pltpu.PrefetchScalarGridSpec(
            num_scalar_prefetch=0,
            grid=grid,
            in_specs=[
                pl.BlockSpec((tm, c_in_p), lambda i: (i, 0)),
                pl.BlockSpec((c_in_p, c_out_p), lambda i: (0, 0)),
                pl.BlockSpec((1, c_out_p), lambda i: (0, 0)),
            ],
            out_specs=pl.BlockSpec((tm, c_out_p), lambda i: (i, 0)),
        ),
        compiler_params=pltpu.CompilerParams(
            dimension_semantics=("parallel",),
            vmem_limit_bytes=vmem_limit,
        ),
        cost_estimate=cost,
    )(x2d, w2d, shift)

    # Strip channel padding, back to NCHW, restore the input dtype (cast is
    # fused with the back-transpose).
    out2d = out2d[:, :c_out]
    out = jnp.transpose(out2d.reshape(n, ho, wo, c_out), (0, 3, 1, 2))
    return out.astype(out_dtype)


def _reference(x, conv_w, bn_gamma, bn_beta, bn_mean, bn_var, stride=2, eps=1e-5):
    x_s = x[:, :, ::stride, ::stride]
    y = jnp.einsum('nchw,oc->nohw', x_s, conv_w.reshape(conv_w.shape[0], -1))
    scale = bn_gamma / jnp.sqrt(bn_var + eps)
    shift = bn_beta - bn_mean * scale
    y = y * scale[None, :, None, None] + shift[None, :, None, None]
    return jnp.maximum(y, 0.0)


if __name__ == "__main__":
    key = jax.random.PRNGKey(0)
    k_x, k_w, k_g, k_b, k_m, k_v = jax.random.split(key, 6)

    N, C_IN, H, W = 2, 4, 16, 16
    C_OUT, STRIDE = 8, 2

    x = jax.random.normal(k_x, (N, C_IN, H, W), dtype=jnp.float32)
    conv_w = jax.random.normal(k_w, (C_OUT, C_IN, 1, 1), dtype=jnp.float32) * 0.1
    bn_gamma = 1.0 + 0.1 * jax.random.normal(k_g, (C_OUT,), dtype=jnp.float32)
    bn_beta = 0.1 * jax.random.normal(k_b, (C_OUT,), dtype=jnp.float32)
    bn_mean = 0.1 * jax.random.normal(k_m, (C_OUT,), dtype=jnp.float32)
    bn_var = jnp.abs(jax.random.normal(k_v, (C_OUT,), dtype=jnp.float32)) + 0.5

    out = downsample_forward(x, conv_w, bn_gamma, bn_beta, bn_mean, bn_var,
                             stride=STRIDE)
    out = jax.block_until_ready(out)

    ref = _reference(x, conv_w, bn_gamma, bn_beta, bn_mean, bn_var, stride=STRIDE)
    assert out.shape == (N, C_OUT, H // STRIDE, W // STRIDE), out.shape
    assert out.dtype == x.dtype, out.dtype
    # bf16 activations / scale-folded bf16 weights / bf16 kernel output ->
    # loosened tolerance vs the f32 reference.
    assert jnp.allclose(out, ref, atol=3e-2, rtol=3e-2), "mismatch vs reference"

    print("KERNEL_OK")
</pallas_src>

<mosaic_0001>
module attributes {stable_mosaic.version = 11 : i64} {
  func.func @_downsample_kernel(%arg0: i32, %arg1: memref<64x128xbf16, #tpu.memory_space<vmem>>, %arg2: memref<128x128xbf16, #tpu.memory_space<vmem>>, %arg3: memref<1x128xf32, #tpu.memory_space<vmem>>, %arg4: memref<64x128xbf16, #tpu.memory_space<vmem>>) attributes {dimension_semantics = [#tpu.dimension_semantics<parallel>], iteration_bounds = array<i64: 2>, scalar_prefetch = 0 : i64, scratch_operands = 0 : i64, tpu.core_type = #tpu.core_type<tc>, window_params = [{transform_indices = @transform_0, window_bounds = array<i64: 64, 128>}, {pipeline_mode = #tpu.pipeline_mode<synchronous>, transform_indices = @transform_1, window_bounds = array<i64: 128, 128>}, {pipeline_mode = #tpu.pipeline_mode<synchronous>, transform_indices = @transform_2, window_bounds = array<i64: 1, 128>}, {transform_indices = @transform_3, window_bounds = array<i64: 64, 128>}]} {
    %c0 = arith.constant 0 : index
    %c0_0 = arith.constant 0 : index
    %0 = vector.load %arg1[%c0, %c0_0] : memref<64x128xbf16, #tpu.memory_space<vmem>>, vector<64x128xbf16>
    %c0_1 = arith.constant 0 : index
    %c0_2 = arith.constant 0 : index
    %1 = vector.load %arg2[%c0_1, %c0_2] : memref<128x128xbf16, #tpu.memory_space<vmem>>, vector<128x128xbf16>
    %cst = arith.constant dense<0.000000e+00> : vector<64x128xf32>
    %2 = tpu.matmul %0, %1, %cst {dimension_numbers = #tpu.dot_dimension_numbers<[1], [0], [0], [1], [0, 0, 1, 1], [], []>} : vector<64x128xbf16>, vector<128x128xbf16>, vector<64x128xf32> -> vector<64x128xf32>
    %c0_3 = arith.constant 0 : index
    %c0_4 = arith.constant 0 : index
    %3 = vector.load %arg3[%c0_3, %c0_4] : memref<1x128xf32, #tpu.memory_space<vmem>>, vector<1x128xf32>
    %4 = vector.broadcast %3 : vector<1x128xf32> to vector<64x128xf32>
    %5 = arith.addf %2, %4 : vector<64x128xf32>
    %cst_5 = arith.constant 0.000000e+00 : f32
    %6 = vector.broadcast %cst_5 : f32 to vector<64x128xf32>
    %7 = arith.maximumf %5, %6 : vector<64x128xf32>
    %8 = arith.truncf %7 : vector<64x128xf32> to vector<64x128xbf16>
    %c0_6 = arith.constant 0 : index
    %c0_7 = arith.constant 0 : index
    %9 = vector.load %arg4[%c0_6, %c0_7] : memref<64x128xbf16, #tpu.memory_space<vmem>>, vector<64x128xbf16>
    tpu.vector_store %arg4[%c0_6, %c0_7], %8 {strides = array<i32>} : memref<64x128xbf16, #tpu.memory_space<vmem>>, vector<64x128xbf16>,
    return
  }
  func.func @transform_0(%arg0: i32) -> (i32, i32) {
    %c0_i32 = arith.constant 0 : i32
    %c0_i32_0 = arith.constant 0 : i32
    return %arg0, %c0_i32 : i32, i32
  }
  func.func @transform_1(%arg0: i32) -> (i32, i32) {
    %c0_i32 = arith.constant 0 : i32
    %c0_i32_0 = arith.constant 0 : i32
    %c0_i32_1 = arith.constant 0 : i32
    return %c0_i32, %c0_i32_0 : i32, i32
  }
  func.func @transform_2(%arg0: i32) -> (i32, i32) {
    %c0_i32 = arith.constant 0 : i32
    %c0_i32_0 = arith.constant 0 : i32
    %c0_i32_1 = arith.constant 0 : i32
    return %c0_i32, %c0_i32_0 : i32, i32
  }
  func.func @transform_3(%arg0: i32) -> (i32, i32) {
    %c0_i32 = arith.constant 0 : i32
    %c0_i32_0 = arith.constant 0 : i32
    return %arg0, %c0_i32 : i32, i32
  }
}

</mosaic_0001>

<llo_original>
// kernel: downsample_forward.1
$region0: #{downsample_forward.1}
  #allocation0 [shape = 'u32[]', space=smem, size = 0x4, offset = 0x4, fixed_abs, tag = 'smem constant byte address 0x4 - core index']
  #allocation1 [shape = 'u32[144,128]{1,0:T(1,128)}', space=vmem, size = 0x12000, scoped, tag = 'internal scratch']
  %s0 = inlined_call_operand.vmem [shape: bf16[128,128], index: 0, kind: input, shape index: {}]
  %s1 = inlined_call_operand.vmem [shape: bf16[128,128], index: 1, kind: input, shape index: {}]
  %s2 = inlined_call_operand.vmem [shape: f32[1,128], index: 2, kind: input, shape index: {}]
  %s3 = inlined_call_operand.vmem [shape: bf16[128,128], index: 3, kind: output, shape index: {}]
  %s4 = sld [smem:[#allocation0]]
  $region45: #{downsample_forward.1} parent=0
    _
  %s6 = ssub.s32 1, %s4
  %s7 = scalar_select 0, %s6, %s4
  loop: start=0, step=1, limit=4
  $region2: #{downsample_forward.1} parent=0 // loop_pre_header
    _
  $region3: #{downsample_forward.1} parent=0 // loop_header
    %s9 = sphi 0, %s13
    %p10 = scmp.ge.s32.totalorder %s9, 4
    %s19 = sphi 0, %s21
    %s22 = sphi 0, %s19
    %s23 = sphi 0, %s22
    %s39 = sphi 0, %s23
    %s43 = sphi 0, %s43
    %s45 = sphi 0, %s43
    %s46 = sphi 0, %s45
    %s60 = sphi 0, %s46
    %s64 = sphi 0, %s64
    %s66 = sphi 0, %s64
    %s67 = sphi 0, %s66
    %s81 = sphi 0, %s67
    %s87 = sphi 0, %s89
    %s90 = sphi 0, %s87
    %s91 = sphi 0, %s90
    %s107 = sphi 0, %s91
  $region4: #{downsample_forward.1} parent=0 // loop_header_branch
    %12 = sbr.rel (%p10) target = $region8
  $region5: #{downsample_forward.1} parent=0 // loop_body
    %s14 = ssub.s32 %s9, 1
    %s15 = ssub.s32 %s9, 2
    %s16 = sadd.s32 %s9, 1
    %s17 = ssub.s32 %s9, %s16
    %p18 = scmp.eq.s32.totalorder %s17, 0
    %s20 = sadd.s32 %s19, 1
    %s21 = scalar_select %p18, %s19, %s20
    %p24 = pneg %p18
    %p25 = scmp.eq.s32.totalorder %s9, 1
    %p26 = por %p24, %p25
    %p27 = scmp.ne.s32.totalorder %s19, %s22
    %p28 = scmp.eq.s32.totalorder %s9, 0
    %p29 = por %p27, %p28
    %p30 = scmp.ne.s32.totalorder %s19, %s22
    %p31 = scmp.eq.s32.totalorder %s14, 1
    %p32 = por %p30, %p31
    %p33 = scmp.ne.s32.totalorder %s22, %s23
    %p34 = scmp.eq.s32.totalorder %s14, 0
    %p35 = por %p33, %p34
    %p36 = scmp.ne.s32.totalorder %s22, %s23
    %p37 = scmp.eq.s32.totalorder %s15, 1
    %p38 = por %p36, %p37
    %p40 = scmp.ne.s32.totalorder %s23, %s39
    %p41 = scmp.eq.s32.totalorder %s15, 0
    %p42 = por %p40, %p41
    %s44 = sadd.s32 %s43, 1
    %p47 = scmp.eq.s32.totalorder %s9, 1
    %p48 = scmp.ne.s32.totalorder %s43, %s45
    %p49 = scmp.eq.s32.totalorder %s9, 0
    %p50 = por %p48, %p49
    %p51 = scmp.ne.s32.totalorder %s43, %s45
    %p52 = scmp.eq.s32.totalorder %s14, 1
    %p53 = por %p51, %p52
    %p54 = scmp.ne.s32.totalorder %s45, %s46
    %p55 = scmp.eq.s32.totalorder %s14, 0
    %p56 = por %p54, %p55
    %p57 = scmp.ne.s32.totalorder %s45, %s46
    %p58 = scmp.eq.s32.totalorder %s15, 1
    %p59 = por %p57, %p58
    %p61 = scmp.ne.s32.totalorder %s46, %s60
    %p62 = scmp.eq.s32.totalorder %s15, 0
    %p63 = por %p61, %p62
    %s65 = sadd.s32 %s64, 1
    %p68 = scmp.eq.s32.totalorder %s9, 1
    %p69 = scmp.ne.s32.totalorder %s64, %s66
    %p70 = scmp.eq.s32.totalorder %s9, 0
    %p71 = por %p69, %p70
    %p72 = scmp.ne.s32.totalorder %s64, %s66
    %p73 = scmp.eq.s32.totalorder %s14, 1
    %p74 = por %p72, %p73
    %p75 = scmp.ne.s32.totalorder %s66, %s67
    %p76 = scmp.eq.s32.totalorder %s14, 0
    %p77 = por %p75, %p76
    %p78 = scmp.ne.s32.totalorder %s66, %s67
    %p79 = scmp.eq.s32.totalorder %s15, 1
    %p80 = por %p78, %p79
    %p82 = scmp.ne.s32.totalorder %s67, %s81
    %p83 = scmp.eq.s32.totalorder %s15, 0
    %p84 = por %p82, %p83
    %s85 = ssub.s32 %s9, %s16
    %p86 = scmp.eq.s32.totalorder %s85, 0
    %s88 = sadd.s32 %s87, 1
    %s89 = scalar_select %p86, %s87, %s88
    %p92 = pneg %p86
    %p93 = scmp.eq.s32.totalorder %s9, 1
    %p94 = por %p92, %p93
    %p95 = scmp.ne.s32.totalorder %s87, %s90
    %p96 = scmp.eq.s32.totalorder %s9, 0
    %p97 = por %p95, %p96
    %p98 = scmp.ne.s32.totalorder %s87, %s90
    %p99 = scmp.eq.s32.totalorder %s14, 1
    %p100 = por %p98, %p99
    %p101 = scmp.ne.s32.totalorder %s90, %s91
    %p102 = scmp.eq.s32.totalorder %s14, 0
    %p103 = por %p101, %p102
    %p104 = scmp.ne.s32.totalorder %s90, %s91
    %p105 = scmp.eq.s32.totalorder %s15, 1
    %p106 = por %p104, %p105
    %p108 = scmp.ne.s32.totalorder %s91, %s107
    %p109 = scmp.eq.s32.totalorder %s15, 0
    %p110 = por %p108, %p109
    %p111 = scmp.le.s32.totalorder 1, %s9
    %p112 = scmp.lt.s32.totalorder %s9, 3
    %p113 = pnand %p111, %p112
    %p114 = pneg %p113
    // Predicated region
    $region9: #{downsample_forward.1} parent=5 // pred_check
      _
    $region10: #{downsample_forward.1} parent=5 // pred_check_branch
      %116 = sbr.rel (%p113) target = $region12
    $region11: #{downsample_forward.1} parent=5 // pred_region
      %s117 = ssub.s32 %s9, 1
      // Predicated region
      $region13: #{downsample_forward.1} parent=11 // pred_check
        %p118 = pneg %p56
      $region14: #{downsample_forward.1} parent=11 // pred_check_branch
        %120 = sbr.rel (%p118) target = $region16
      $region15: #{downsample_forward.1} parent=11 // pred_region
        _
      $region16: #{downsample_forward.1} parent=11 // pred_fallthru
        _
      // Predicated region
      $region17: #{downsample_forward.1} parent=11 // pred_check
        %p121 = pneg %p77
      $region18: #{downsample_forward.1} parent=11 // pred_check_branch
        %123 = sbr.rel (%p121) target = $region20
      $region19: #{downsample_forward.1} parent=11 // pred_region
        _
      $region20: #{downsample_forward.1} parent=11 // pred_fallthru
        _
    $region12: #{downsample_forward.1} parent=5 // pred_fallthru
      _
    %p124 = scmp.lt.s32.totalorder %s9, 2
    // Predicated region
    $region21: #{downsample_forward.1} parent=5 // pred_check
      %p125 = pneg %p124
    $region22: #{downsample_forward.1} parent=5 // pred_check_branch
      %127 = sbr.rel (%p125) target = $region24
    $region23: #{downsample_forward.1} parent=5 // pred_region
      // Predicated region
      $region25: #{downsample_forward.1} parent=23 // pred_check
        %p128 = pneg %p29
      $region26: #{downsample_forward.1} parent=23 // pred_check_branch
        %130 = sbr.rel (%p128) target = $region28
      $region27: #{downsample_forward.1} parent=23 // pred_region
        %s131 = smul.u32 8, %s9
        %p132 = scmp.lt.s32.totalorder %s131, 15
        %s133 = scalar_select %p132, %s131, 15
        %s134 = smul.addr %s133, 4
        %s135 = scalar_lea.vmem %s0, %s134
        %s136 = smul.u32 8, %s9
      $region28: #{downsample_forward.1} parent=23 // pred_fallthru
        _
    $region24: #{downsample_forward.1} parent=5 // pred_fallthru
      _
    %p137 = scmp.le.s32.totalorder 1, %s9
    %p138 = scmp.lt.s32.totalorder %s9, 3
    %p139 = pnand %p137, %p138
    %p140 = pneg %p139
    // Predicated region
    $region29: #{downsample_forward.1} parent=5 // pred_check
      _
    $region30: #{downsample_forward.1} parent=5 // pred_check_branch
      %142 = sbr.rel (%p139) target = $region32
    $region31: #{downsample_forward.1} parent=5 // pred_region
      %s143 = ssub.s32 %s9, 1
      %s144 = smul.u32 8, %s14
      %p145 = scmp.lt.s32.totalorder %s144, 15
      %s146 = scalar_select %p145, %s144, 15
      %s147 = smul.addr %s146, 4
      %s148 = scalar_lea.vmem %s0, %s147
      %p149 = pneg %p35
      %p150 = pneg %p32
      %p151 = pneg %p56
      %p152 = pneg %p53
      %p153 = pneg %p77
      %p154 = pneg %p74
      %p155 = pneg %p103
      %p156 = pneg %p100
      %s157 = smul.u32 8, %s14
      %p158 = scmp.lt.s32.totalorder %s157, 15
      %s159 = scalar_select %p158, %s157, 15
      %s160 = smul.addr %s159, 4
      %s161 = scalar_lea.vmem %s3, %s160
      %s162 = smul.u32 8, %s14
      %p163 = scmp.lt.s32.totalorder %s162, 15
      %s164 = scalar_select %p163, %s162, 15
      %s165 = smul.addr %s164, 4
      %s166 = scalar_lea.vmem %s0, %s165
      %s167 = smul.u32 8, %s14
      %s168 = smul.u32 8, %s14
      %p169 = scmp.lt.s32.totalorder %s168, 15
      %s170 = scalar_select %p169, %s168, 15
      %s171 = smul.addr %s170, 4
      %s172 = scalar_lea.vmem %s3, %s171
      %s173 = smul.u32 8, %s14
      %v175 = vld [vmem:[%s166] sm:$0xf]
      %v176 = vld [vmem:[%s166 + $0x4] sm:$0xf]
      %v177 = vld [vmem:[%s166 + $0x8] sm:$0xf]
      %v178 = vld [vmem:[%s166 + $0xc] sm:$0xf]
      %v179 = vld [vmem:[%s166 + $0x10] sm:$0xf]
      %v180 = vld [vmem:[%s166 + $0x14] sm:$0xf]
      %v181 = vld [vmem:[%s166 + $0x18] sm:$0xf]
      %v182 = vld [vmem:[%s166 + $0x1c] sm:$0xf]
      %v183 = vld [vmem:[%s1] sm:$0xf]
      %v184 = vld [vmem:[%s1 + $0x4] sm:$0xf]
      %v185 = vld [vmem:[%s1 + $0x8] sm:$0xf]
      %v186 = vld [vmem:[%s1 + $0xc] sm:$0xf]
      %v187 = vld [vmem:[%s1 + $0x10] sm:$0xf]
      %v188 = vld [vmem:[%s1 + $0x14] sm:$0xf]
      %v189 = vld [vmem:[%s1 + $0x18] sm:$0xf]
      %v190 = vld [vmem:[%s1 + $0x1c] sm:$0xf]
      %v191 = vld [vmem:[%s1 + $0x20] sm:$0xf]
      %v192 = vld [vmem:[%s1 + $0x24] sm:$0xf]
      %v193 = vld [vmem:[%s1 + $0x28] sm:$0xf]
      %v194 = vld [vmem:[%s1 + $0x2c] sm:$0xf]
      %v195 = vld [vmem:[%s1 + $0x30] sm:$0xf]
      %v196 = vld [vmem:[%s1 + $0x34] sm:$0xf]
      %v197 = vld [vmem:[%s1 + $0x38] sm:$0xf]
      %v198 = vld [vmem:[%s1 + $0x3c] sm:$0xf]
      %v199 = vld [vmem:[%s2] sm:$0x1]
      %v201 = vlaneseq
      %v202 = vshrl.u32 %v201, 7
      %v203 = vsub.s32 0, %v202
      %v204 = vrot.slane %v199, %v203
      %v214 = vunpack.c.l.b16 %v175
      %v215 = vunpack.c.l.b16 %v176
      %v216 = vunpack.c.l.b16 %v177
      %v217 = vunpack.c.l.b16 %v178
      %v218 = vunpack.c.l.b16 %v179
      %v219 = vunpack.c.l.b16 %v180
      %v220 = vunpack.c.l.b16 %v181
      %v221 = vunpack.c.l.b16 %v182
      %v222 = vpack.c.b16 %v215, %v214
      %v223 = vpack.c.b16 %v217, %v216
      %v224 = vpack.c.b16 %v219, %v218
      %v225 = vpack.c.b16 %v221, %v220
      %v246 = vunpack.c.l.b16 %v183
      %v247 = vunpack.c.l.b16 %v184
      %v248 = vunpack.c.l.b16 %v185
      %v249 = vunpack.c.l.b16 %v186
      %v250 = vunpack.c.l.b16 %v187
      %v251 = vunpack.c.l.b16 %v188
      %v252 = vunpack.c.l.b16 %v189
      %v253 = vunpack.c.l.b16 %v190
      %v254 = vunpack.c.l.b16 %v191
      %v255 = vunpack.c.l.b16 %v192
      %v256 = vunpack.c.l.b16 %v193
      %v257 = vunpack.c.l.b16 %v194
      %v258 = vunpack.c.l.b16 %v195
      %v259 = vunpack.c.l.b16 %v196
      %v260 = vunpack.c.l.b16 %v197
      %v261 = vunpack.c.l.b16 %v198
      %v262 = vpack.c.b16 %v247, %v246
      %v263 = vpack.c.b16 %v249, %v248
      %v264 = vpack.c.b16 %v251, %v250
      %v265 = vpack.c.b16 %v253, %v252
      %v266 = vpack.c.b16 %v255, %v254
      %v267 = vpack.c.b16 %v257, %v256
      %v268 = vpack.c.b16 %v259, %v258
      %v269 = vpack.c.b16 %v261, %v260
      %278 = vmatprep.subr.bf16.mxu0 0
      %279 = vmatpush1.bf16.msra.mxu0 %v262
      %280 = vmatprep.subr.bf16.mxu0 0
      %281 = vmatpush1.bf16.msra.mxu0 %v263
      %282 = vmatprep.subr.bf16.mxu0 0
      %283 = vmatpush1.bf16.msra.mxu0 %v264
      %284 = vmatprep.subr.bf16.mxu0 0
      %285 = vmatpush1.bf16.msra.mxu0 %v265
      %286 = vmatprep.subr.bf16.mxu0 0
      %287 = vmatpush1.bf16.msra.mxu0 %v266
      %288 = vmatprep.subr.bf16.mxu0 0
      %289 = vmatpush1.bf16.msra.mxu0 %v267
      %290 = vmatprep.subr.bf16.mxu0 0
      %291 = vmatpush1.bf16.msra.mxu0 %v268
      %292 = vmatprep.subr.bf16.mxu0 0
      %293 = vmatpush1.bf16.msra.mxu0 %v269
      %294 = vmatprep.subr.bf16.mxu0 0
      %295 = vmatpush1.bf16.msra.mxu0 0
      %296 = vmatprep.subr.bf16.mxu0 0
      %297 = vmatpush1.bf16.msra.mxu0 0
      %298 = vmatprep.subr.bf16.mxu0 0
      %299 = vmatpush1.bf16.msra.mxu0 0
      %300 = vmatprep.subr.bf16.mxu0 0
      %301 = vmatpush1.bf16.msra.mxu0 0
      %302 = vmatprep.subr.bf16.mxu0 0
      %303 = vmatpush1.bf16.msra.mxu0 0
      %304 = vmatprep.subr.bf16.mxu0 0
      %305 = vmatpush1.bf16.msra.mxu0 0
      %306 = vmatprep.subr.bf16.mxu0 0
      %307 = vmatpush1.bf16.msra.mxu0 0
      %308 = vmatprep.subr.bf16.mxu0 0
      %309 = vmatpush1.bf16.msra.mxu0 0
      %310 = vmatprep.mubr.bf16.mxu0 0
      %311 = vmatmul.mubr.bf16.gmra.mrb[0].mxu0 %v222
      %v312 = vpop.f32.mrb[0].mxu0
      %v313 = vadd.f32 %v204, %v312
      %v314 = vpop.f32.mrb[0].mxu0
      %v315 = vpop.f32.mrb[0].mxu0
      %v316 = vadd.f32 %v204, %v315
      %v317 = vpop.f32.mrb[0].mxu0
      %318 = vmatprep.mubr.bf16.mxu0 0
      %319 = vmatmul.mubr.bf16.gmra.mrb[0].mxu0 %v223
      %v320 = vpop.f32.mrb[0].mxu0
      %v321 = vadd.f32 %v204, %v320
      %v322 = vpop.f32.mrb[0].mxu0
      %v323 = vpop.f32.mrb[0].mxu0
      %v324 = vadd.f32 %v204, %v323
      %v325 = vpop.f32.mrb[0].mxu0
      %326 = vmatprep.mubr.bf16.mxu0 0
      %327 = vmatmul.mubr.bf16.gmra.mrb[0].mxu0 %v224
      %v328 = vpop.f32.mrb[0].mxu0
      %v329 = vadd.f32 %v204, %v328
      %v330 = vpop.f32.mrb[0].mxu0
      %v331 = vpop.f32.mrb[0].mxu0
      %v332 = vadd.f32 %v204, %v331
      %v333 = vpop.f32.mrb[0].mxu0
      %334 = vmatprep.mubr.bf16.mxu0 0
      %335 = vmatmul.mubr.bf16.gmra.mrb[0].mxu0 %v225
      %v336 = vpop.f32.mrb[0].mxu0
      %v337 = vadd.f32 %v204, %v336
      %v338 = vpop.f32.mrb[0].mxu0
      %v339 = vpop.f32.mrb[0].mxu0
      %v340 = vadd.f32 %v204, %v339
      %v341 = vpop.f32.mrb[0].mxu0
      %342 = vdwg.mxu0
      %v343 = vmax.f32 %v313, 0.0
      %v344 = vmax.f32 %v316, 0.0
      %v345 = vmax.f32 %v321, 0.0
      %v346 = vmax.f32 %v324, 0.0
      %v347 = vmax.f32 %v329, 0.0
      %v348 = vmax.f32 %v332, 0.0
      %v349 = vmax.f32 %v337, 0.0
      %v350 = vmax.f32 %v340, 0.0
      %v351 = vpack.c.bf16 %v344, %v343
      %v352 = vpack.c.bf16 %v346, %v345
      %v353 = vpack.c.bf16 %v348, %v347
      %v354 = vpack.c.bf16 %v350, %v349
      %v359 = vunpack.c.l.b16 %v351
      %v360 = vunpack.c.h.b16 %v351
      %v361 = vunpack.c.l.b16 %v352
      %v362 = vunpack.c.h.b16 %v352
      %v363 = vunpack.c.l.b16 %v353
      %v364 = vunpack.c.h.b16 %v353
      %v365 = vunpack.c.l.b16 %v354
      %v366 = vunpack.c.h.b16 %v354
      %v367 = vpack.c.b16 %v359, %v359
      %v368 = vpack.c.b16 %v360, %v360
      %v369 = vpack.c.b16 %v361, %v361
      %v370 = vpack.c.b16 %v362, %v362
      %v371 = vpack.c.b16 %v363, %v363
      %v372 = vpack.c.b16 %v364, %v364
      %v373 = vpack.c.b16 %v365, %v365
      %v374 = vpack.c.b16 %v366, %v366
      %383 = vst [vmem:[%s172] sm:$0xf] %v367
      %384 = vst [vmem:[%s172 + $0x4] sm:$0xf] %v368
      %385 = vst [vmem:[%s172 + $0x8] sm:$0xf] %v369
      %386 = vst [vmem:[%s172 + $0xc] sm:$0xf] %v370
      %387 = vst [vmem:[%s172 + $0x10] sm:$0xf] %v371
      %388 = vst [vmem:[%s172 + $0x14] sm:$0xf] %v372
      %389 = vst [vmem:[%s172 + $0x18] sm:$0xf] %v373
      %390 = vst [vmem:[%s172 + $0x1c] sm:$0xf] %v374
      %s391 = smul.u32 8, %s14
      %p392 = scmp.lt.s32.totalorder %s391, 15
      %s393 = scalar_select %p392, %s391, 15
      %s394 = smul.addr %s393, 4
      %s395 = scalar_lea.vmem %s3, %s394
      // Predicated region
      $region33: #{downsample_forward.1} parent=31 // pred_check
        %p396 = pneg %p100
      $region34: #{downsample_forward.1} parent=31 // pred_check_branch
        %398 = sbr.rel (%p396) target = $region36
      $region35: #{downsample_forward.1} parent=31 // pred_region
        %s399 = smul.u32 8, %s14
      $region36: #{downsample_forward.1} parent=31 // pred_fallthru
        _
    $region32: #{downsample_forward.1} parent=5 // pred_fallthru
      _
    %p400 = scmp.le.s32.totalorder 2, %s9
    // Predicated region
    $region37: #{downsample_forward.1} parent=5 // pred_check
      %p401 = pneg %p400
    $region38: #{downsample_forward.1} parent=5 // pred_check_branch
      %403 = sbr.rel (%p401) target = $region40
    $region39: #{downsample_forward.1} parent=5 // pred_region
      %s404 = ssub.s32 %s9, 2
      // Predicated region
      $region41: #{downsample_forward.1} parent=39 // pred_check
        %p405 = pneg %p106
      $region42: #{downsample_forward.1} parent=39 // pred_check_branch
        %407 = sbr.rel (%p405) target = $region44
      $region43: #{downsample_forward.1} parent=39 // pred_region
        %s408 = smul.u32 8, %s15
        %p409 = scmp.lt.s32.totalorder %s408, 15
        %s410 = scalar_select %p409, %s408, 15
        %s411 = smul.addr %s410, 4
        %s412 = scalar_lea.vmem %s3, %s411
      $region44: #{downsample_forward.1} parent=39 // pred_fallthru
        _
    $region40: #{downsample_forward.1} parent=5 // pred_fallthru
      _
  $region6: #{downsample_forward.1} parent=0 // loop_footer
    %s13 = sadd.s32 1, %s9
  $region7: #{downsample_forward.1} parent=0 // loop_footer_branch
    %8 = sbr.rel target = $region3
  $region8: #{downsample_forward.1} parent=0 // loop_exit
    _

</llo_original>
